<compile_context>
chip_gen: v6e
topology: v6e:2x2x1
jax: 0.10.0
libtpu: 0.0.40
codegen_flags: <defaults>
</compile_context>

<pallas_src>
import functools

import jax
import jax.numpy as jnp
from jax import lax
from jax.experimental import pallas as pl
from jax.experimental.pallas import tpu as pltpu

_COLS = 1024            # lane-dense output width (8x the 128-lane vreg width)
_MAX_BLOCK_ROWS = 256   # 256 * 1024 * 4B = 1 MiB f32 per output block


def _hash_u32(x):
    """lowbias32-style integer finalizer (good avalanche, cheap VPU ops)."""
    x = x ^ (x >> 16)
    x = x * jnp.uint32(0x7FEB352D)
    x = x ^ (x >> 15)
    x = x * jnp.uint32(0x846CA68B)
    x = x ^ (x >> 16)
    return x


def _random_bits(idx_u32, seed_u32, stream):
    """Stateless counter-based random bits: hash(global index, seed, stream)."""
    x = idx_u32 * jnp.uint32(0x9E3779B9)
    x = x ^ (seed_u32 * jnp.uint32(0x85EBCA6B))
    x = x ^ jnp.uint32((stream * 0xC2B2AE35) & 0xFFFFFFFF)
    return _hash_u32(x)


def _bits_to_uniform(bits_u32):
    """uint32 bits -> float32 uniform in [0, 1) via the mantissa trick."""
    mant = bits_u32 >> 9
    fbits = mant | jnp.uint32(0x3F800000)                    # [1, 2)
    return lax.bitcast_convert_type(fbits, jnp.float32) - 1.0  # [0, 1)


def _global_index(block_shape):
    """Global flat element index (row-major over the full padded output)."""
    block_rows, cols = block_shape
    i = pl.program_id(0)
    row = lax.broadcasted_iota(jnp.int32, block_shape, 0) + i * block_rows
    col = lax.broadcasted_iota(jnp.int32, block_shape, 1)
    return (row * cols + col).astype(jnp.uint32)


def _random_value_kernel(seed_ref, out_ref, *, distribution, p0, p1):
    seed_u = seed_ref[0].astype(jnp.uint32)
    block_rows, cols = out_ref.shape

    if distribution == "uniform":
        idx = _global_index((block_rows, cols))
        sample = _bits_to_uniform(_random_bits(idx, seed_u, 0))
    elif distribution == "normal":
        # Paired Box-Muller: one (u1, u2) pair yields TWO outputs, halving the
        # transcendental (EUP) work and the random-bit generation per element.
        half = cols // 2
        idx = _global_index((block_rows, half))
        u1 = 1.0 - _bits_to_uniform(_random_bits(idx, seed_u, 1))   # (0, 1]
        u2 = _bits_to_uniform(_random_bits(idx, seed_u, 2))         # [0, 1)
        r = jnp.sqrt(-2.0 * jnp.log(u1))
        theta = (2.0 * jnp.pi) * u2
        z0 = r * jnp.cos(theta)
        z1 = r * jnp.sin(theta)
        sample = jnp.concatenate([z0, z1], axis=-1)
    else:
        raise ValueError(f"Unknown distribution {distribution}")

    # p0/p1 are static Python floats -> trace-time branch (skip the FMA in the
    # default p0=1, p1=0 case; the uniform path is HBM-write bound).
    if p0 != 1.0 or p1 != 0.0:
        sample = sample * jnp.float32(p0) + jnp.float32(p1)
    out_ref[...] = sample


def random_value_forward(x, n, *, seed=0, distribution="uniform", p0=1.0, p1=0.0):
    """Pallas equivalent of RandomValue.forward(x, n).  `x` is ignored."""
    del x  # forward ignores its input, exactly like the PyTorch module

    rows = max(pl.cdiv(n, _COLS), 1)
    rows = ((rows + 7) // 8) * 8                      # f32 sublane tile of 8
    block_rows = min(rows, _MAX_BLOCK_ROWS)
    rows = ((rows + block_rows - 1) // block_rows) * block_rows
    grid = (rows // block_rows,)

    kernel = functools.partial(
        _random_value_kernel,
        distribution=distribution, p0=float(p0), p1=float(p1))

    out = pl.pallas_call(
        kernel,
        out_shape=jax.ShapeDtypeStruct((rows, _COLS), jnp.float32),
        grid=grid,
        in_specs=[pl.BlockSpec(memory_space=pltpu.SMEM)],
        out_specs=pl.BlockSpec((block_rows, _COLS), lambda i: (i, 0)),
        compiler_params=pltpu.CompilerParams(
            dimension_semantics=("parallel",)),
    )(jnp.array([seed], dtype=jnp.int32))

    return out.reshape(-1)[:n]


if __name__ == "__main__":
    key = jax.random.PRNGKey(0)
    # Small example input consistent with an NCHW feature map; it is ignored by
    # the forward pass, just as in the PyTorch module.
    x = jax.random.normal(key, (2, 4, 16, 16), dtype=jnp.float32)

    # Module defaults: distribution='uniform', p0=1, p1=0.
    n = 8
    y_u = jax.block_until_ready(
        random_value_forward(x, n, seed=0, distribution="uniform", p0=1.0, p1=0.0))
    assert y_u.shape == (n,) and y_u.dtype == jnp.float32
    assert bool(jnp.all(y_u >= 0.0)) and bool(jnp.all(y_u < 1.0))

    # Determinism: same seed -> same values.
    y_u2 = jax.block_until_ready(
        random_value_forward(x, n, seed=0, distribution="uniform"))
    assert bool(jnp.all(y_u == y_u2))

    # Normal path with scale/shift, sized to exercise a multi-block grid.
    n_big = 300_000
    y_n = jax.block_until_ready(
        random_value_forward(x, n_big, seed=3, distribution="normal", p0=2.0, p1=1.0))
    assert y_n.shape == (n_big,) and y_n.dtype == jnp.float32
    assert bool(jnp.all(jnp.isfinite(y_n)))
    # Rough moment check: mean ~ p1 = 1, std ~ p0 = 2.
    assert abs(float(jnp.mean(y_n)) - 1.0) < 0.1
    assert abs(float(jnp.std(y_n)) - 2.0) < 0.1

    print("KERNEL_OK")
</pallas_src>

<mosaic_0001>
module attributes {stable_mosaic.version = 11 : i64} {
  func.func @_random_value_kernel(%arg0: i32, %arg1: memref<1xi32, #tpu.memory_space<smem>>, %arg2: memref<8x1024xf32, #tpu.memory_space<vmem>>) attributes {dimension_semantics = [#tpu.dimension_semantics<parallel>], iteration_bounds = array<i64: 1>, scalar_prefetch = 0 : i64, scratch_operands = 0 : i64, tpu.core_type = #tpu.core_type<tc>, window_params = [{transform_indices = @transform_0, window_bounds = array<i64: 1>}, {transform_indices = @transform_1, window_bounds = array<i64: 8, 1024>}]} {
    %c0 = arith.constant 0 : index
    %0 = memref.load %arg1[%c0] : memref<1xi32, #tpu.memory_space<smem>>
    %1 = tpu.iota {dimensions = array<i32: 0>} : vector<8x1024xi32>
    %c8_i32 = arith.constant 8 : i32
    %2 = arith.muli %arg0, %c8_i32 : i32
    %3 = vector.broadcast %2 : i32 to vector<8x1024xi32>
    %4 = arith.addi %1, %3 : vector<8x1024xi32>
    %5 = tpu.iota {dimensions = array<i32: 1>} : vector<8x1024xi32>
    %c1024_i32 = arith.constant 1024 : i32
    %6 = vector.broadcast %c1024_i32 : i32 to vector<8x1024xi32>
    %7 = arith.muli %4, %6 : vector<8x1024xi32>
    %8 = arith.addi %7, %5 : vector<8x1024xi32>
    %c-1640531527_i32 = arith.constant -1640531527 : i32
    %9 = vector.broadcast %c-1640531527_i32 : i32 to vector<8x1024xi32>
    %10 = arith.muli %8, %9 : vector<8x1024xi32>
    %c-2048144789_i32 = arith.constant -2048144789 : i32
    %11 = arith.muli %0, %c-2048144789_i32 : i32
    %12 = vector.broadcast %11 : i32 to vector<8x1024xi32>
    %13 = arith.xori %10, %12 : vector<8x1024xi32>
    %c0_i32 = arith.constant 0 : i32
    %14 = vector.broadcast %c0_i32 : i32 to vector<8x1024xi32>
    %15 = arith.xori %13, %14 : vector<8x1024xi32>
    %c16_i32 = arith.constant 16 : i32
    %16 = vector.broadcast %c16_i32 : i32 to vector<8x1024xi32>
    %17 = arith.shrui %15, %16 : vector<8x1024xi32>
    %18 = arith.xori %15, %17 : vector<8x1024xi32>
    %c2146121005_i32 = arith.constant 2146121005 : i32
    %19 = vector.broadcast %c2146121005_i32 : i32 to vector<8x1024xi32>
    %20 = arith.muli %18, %19 : vector<8x1024xi32>
    %c15_i32 = arith.constant 15 : i32
    %21 = vector.broadcast %c15_i32 : i32 to vector<8x1024xi32>
    %22 = arith.shrui %20, %21 : vector<8x1024xi32>
    %23 = arith.xori %20, %22 : vector<8x1024xi32>
    %c-2073254261_i32 = arith.constant -2073254261 : i32
    %24 = vector.broadcast %c-2073254261_i32 : i32 to vector<8x1024xi32>
    %25 = arith.muli %23, %24 : vector<8x1024xi32>
    %c16_i32_0 = arith.constant 16 : i32
    %26 = vector.broadcast %c16_i32_0 : i32 to vector<8x1024xi32>
    %27 = arith.shrui %25, %26 : vector<8x1024xi32>
    %28 = arith.xori %25, %27 : vector<8x1024xi32>
    %c9_i32 = arith.constant 9 : i32
    %29 = vector.broadcast %c9_i32 : i32 to vector<8x1024xi32>
    %30 = arith.shrui %28, %29 : vector<8x1024xi32>
    %c1065353216_i32 = arith.constant 1065353216 : i32
    %31 = vector.broadcast %c1065353216_i32 : i32 to vector<8x1024xi32>
    %32 = arith.ori %30, %31 : vector<8x1024xi32>
    %33 = tpu.bitcast %32 : vector<8x1024xi32> -> vector<8x1024xf32>
    %cst = arith.constant 1.000000e+00 : f32
    %34 = vector.broadcast %cst : f32 to vector<8x1024xf32>
    %35 = arith.subf %33, %34 : vector<8x1024xf32>
    %c0_1 = arith.constant 0 : index
    %c0_2 = arith.constant 0 : index
    %36 = vector.load %arg2[%c0_1, %c0_2] : memref<8x1024xf32, #tpu.memory_space<vmem>>, vector<8x1024xf32>
    tpu.vector_store %arg2[%c0_1, %c0_2], %35 {strides = array<i32>} : memref<8x1024xf32, #tpu.memory_space<vmem>>, vector<8x1024xf32>,
    return
  }
  func.func @transform_0(%arg0: i32) -> i32 {
    %c0_i32 = arith.constant 0 : i32
    %c0_i32_0 = arith.constant 0 : i32
    return %c0_i32 : i32
  }
  func.func @transform_1(%arg0: i32) -> (i32, i32) {
    %c0_i32 = arith.constant 0 : i32
    %c0_i32_0 = arith.constant 0 : i32
    return %arg0, %c0_i32 : i32, i32
  }
}

</mosaic_0001>

<llo_original>
// kernel: tpu_custom_call.1
$region0: #{tpu_custom_call.1}
  #allocation0 [shape = 'u32[]', space=smem, size = 0x4, offset = 0x4, fixed_abs, tag = 'smem constant byte address 0x4 - core index']
  #allocation1 [shape = 'u32[144,128]{1,0:T(1,128)}', space=vmem, size = 0x12000, scoped, tag = 'internal scratch']
  #allocation2 [shape = 's32[1]{0:T(128)S(6)}', space=smem, size = 0x200, scoped, tag = 'scoped memory for tpu_custom_call.1']
  %s0 = inlined_call_operand.<no memory space> [shape: s32[1], index: 0, kind: input, shape index: {}]
  %s1 = inlined_call_operand.hbm [shape: f32[8,1024], index: 1, kind: output, shape index: {}]
  %s2 = sld [smem:[#allocation0]]
  $region14: #{tpu_custom_call.1} parent=0
    _
  %s4 = ssub.s32 1, %s2
  %s5 = scalar_select 0, %s4, %s2
  %6 = sst [smem:[#allocation2]] %s0
  $region1: #{tpu_custom_call.1} parent=0
    #allocation3 [shape = 'u8[32768]{0}', space=vmem, size = 0x8000, scoped, tag = 'output window, operand 0, single buffered']
    #allocation4 [shape = 's32[1]{0}', space=sflag, size = 0x4, scoped, tag = 'scoped memory for tpu_custom_call.1']
    %7 = vsyncpa [#allocation4], 0
    // Predicated region
    $region2: #{tpu_custom_call.1} parent=1 // pred_check
      _
    $region3: #{tpu_custom_call.1} parent=1 // pred_check_branch
      %9 = sbr.rel (0) target = $region5
    $region4: #{tpu_custom_call.1} parent=1 // pred_region
      _
    $region5: #{tpu_custom_call.1} parent=1 // pred_fallthru
      _
    %s10 = sld [smem:[#allocation2]]
    %v11 = vlaneseq
    %v12 = vshrl.u32 %v11, 7
    %s13 = smul.u32 0, 8
    %v14 = vstv %s13
    %v15 = vadd.s32 %v12, %v14
    %v16 = vlaneseq
    %v17 = vand.u32 %v16, 127
    %v18 = vadd.s32 %v17, 128
    %v19 = vadd.s32 %v17, 256
    %v20 = vadd.s32 %v17, 384
    %v21 = vadd.s32 %v17, 512
    %v22 = vadd.s32 %v17, 640
    %v23 = vadd.s32 %v17, 768
    %v24 = vadd.s32 %v17, 896
    %v25 = vmul.u32 %v15, 1024
    %v26 = vadd.s32 %v25, %v17
    %v27 = vadd.s32 %v25, %v18
    %v28 = vadd.s32 %v25, %v19
    %v29 = vadd.s32 %v25, %v20
    %v30 = vadd.s32 %v25, %v21
    %v31 = vadd.s32 %v25, %v22
    %v32 = vadd.s32 %v25, %v23
    %v33 = vadd.s32 %v25, %v24
    %v34 = vmul.u32 %v26, 2654435769
    %v35 = vmul.u32 %v27, 2654435769
    %v36 = vmul.u32 %v28, 2654435769
    %v37 = vmul.u32 %v29, 2654435769
    %v38 = vmul.u32 %v30, 2654435769
    %v39 = vmul.u32 %v31, 2654435769
    %v40 = vmul.u32 %v32, 2654435769
    %v41 = vmul.u32 %v33, 2654435769
    %s42 = smul.u32 %s10, 2246822507
    %v43 = vstv %s42
    %v44 = vxor.u32 %v34, %v43
    %v45 = vxor.u32 %v35, %v43
    %v46 = vxor.u32 %v36, %v43
    %v47 = vxor.u32 %v37, %v43
    %v48 = vxor.u32 %v38, %v43
    %v49 = vxor.u32 %v39, %v43
    %v50 = vxor.u32 %v40, %v43
    %v51 = vxor.u32 %v41, %v43
    %v52 = vshrl.u32 %v44, 16
    %v53 = vshrl.u32 %v45, 16
    %v54 = vshrl.u32 %v46, 16
    %v55 = vshrl.u32 %v47, 16
    %v56 = vshrl.u32 %v48, 16
    %v57 = vshrl.u32 %v49, 16
    %v58 = vshrl.u32 %v50, 16
    %v59 = vshrl.u32 %v51, 16
    %v60 = vxor.u32 %v44, %v52
    %v61 = vxor.u32 %v45, %v53
    %v62 = vxor.u32 %v46, %v54
    %v63 = vxor.u32 %v47, %v55
    %v64 = vxor.u32 %v48, %v56
    %v65 = vxor.u32 %v49, %v57
    %v66 = vxor.u32 %v50, %v58
    %v67 = vxor.u32 %v51, %v59
    %v68 = vmul.u32 %v60, 2146121005
    %v69 = vmul.u32 %v61, 2146121005
    %v70 = vmul.u32 %v62, 2146121005
    %v71 = vmul.u32 %v63, 2146121005
    %v72 = vmul.u32 %v64, 2146121005
    %v73 = vmul.u32 %v65, 2146121005
    %v74 = vmul.u32 %v66, 2146121005
    %v75 = vmul.u32 %v67, 2146121005
    %v76 = vshrl.u32 %v68, 15
    %v77 = vshrl.u32 %v69, 15
    %v78 = vshrl.u32 %v70, 15
    %v79 = vshrl.u32 %v71, 15
    %v80 = vshrl.u32 %v72, 15
    %v81 = vshrl.u32 %v73, 15
    %v82 = vshrl.u32 %v74, 15
    %v83 = vshrl.u32 %v75, 15
    %v84 = vxor.u32 %v68, %v76
    %v85 = vxor.u32 %v69, %v77
    %v86 = vxor.u32 %v70, %v78
    %v87 = vxor.u32 %v71, %v79
    %v88 = vxor.u32 %v72, %v80
    %v89 = vxor.u32 %v73, %v81
    %v90 = vxor.u32 %v74, %v82
    %v91 = vxor.u32 %v75, %v83
    %v92 = vmul.u32 %v84, 2221713035
    %v93 = vmul.u32 %v85, 2221713035
    %v94 = vmul.u32 %v86, 2221713035
    %v95 = vmul.u32 %v87, 2221713035
    %v96 = vmul.u32 %v88, 2221713035
    %v97 = vmul.u32 %v89, 2221713035
    %v98 = vmul.u32 %v90, 2221713035
    %v99 = vmul.u32 %v91, 2221713035
    %v100 = vshrl.u32 %v92, 16
    %v101 = vshrl.u32 %v93, 16
    %v102 = vshrl.u32 %v94, 16
    %v103 = vshrl.u32 %v95, 16
    %v104 = vshrl.u32 %v96, 16
    %v105 = vshrl.u32 %v97, 16
    %v106 = vshrl.u32 %v98, 16
    %v107 = vshrl.u32 %v99, 16
    %v108 = vxor.u32 %v92, %v100
    %v109 = vxor.u32 %v93, %v101
    %v110 = vxor.u32 %v94, %v102
    %v111 = vxor.u32 %v95, %v103
    %v112 = vxor.u32 %v96, %v104
    %v113 = vxor.u32 %v97, %v105
    %v114 = vxor.u32 %v98, %v106
    %v115 = vxor.u32 %v99, %v107
    %v116 = vshrl.u32 %v108, 9
    %v117 = vshrl.u32 %v109, 9
    %v118 = vshrl.u32 %v110, 9
    %v119 = vshrl.u32 %v111, 9
    %v120 = vshrl.u32 %v112, 9
    %v121 = vshrl.u32 %v113, 9
    %v122 = vshrl.u32 %v114, 9
    %v123 = vshrl.u32 %v115, 9
    %v124 = vor.u32 %v116, 1065353216
    %v125 = vor.u32 %v117, 1065353216
    %v126 = vor.u32 %v118, 1065353216
    %v127 = vor.u32 %v119, 1065353216
    %v128 = vor.u32 %v120, 1065353216
    %v129 = vor.u32 %v121, 1065353216
    %v130 = vor.u32 %v122, 1065353216
    %v131 = vor.u32 %v123, 1065353216
    %v140 = vsub.f32 %v124, 1.0
    %v141 = vsub.f32 %v125, 1.0
    %v142 = vsub.f32 %v126, 1.0
    %v143 = vsub.f32 %v127, 1.0
    %v144 = vsub.f32 %v128, 1.0
    %v145 = vsub.f32 %v129, 1.0
    %v146 = vsub.f32 %v130, 1.0
    %v147 = vsub.f32 %v131, 1.0
    %148 = vst [vmem:[#allocation3] sm:$0xff] %v140
    %149 = vst [vmem:[#allocation3 + $0x8] sm:$0xff] %v141
    %150 = vst [vmem:[#allocation3 + $0x10] sm:$0xff] %v142
    %151 = vst [vmem:[#allocation3 + $0x18] sm:$0xff] %v143
    %152 = vst [vmem:[#allocation3 + $0x20] sm:$0xff] %v144
    %153 = vst [vmem:[#allocation3 + $0x28] sm:$0xff] %v145
    %154 = vst [vmem:[#allocation3 + $0x30] sm:$0xff] %v146
    %155 = vst [vmem:[#allocation3 + $0x38] sm:$0xff] %v147
    // Predicated region
    $region6: #{tpu_custom_call.1} parent=1 // pred_check
      _
    $region7: #{tpu_custom_call.1} parent=1 // pred_check_branch
      %157 = sbr.rel (0) target = $region9
    $region8: #{tpu_custom_call.1} parent=1 // pred_region
      %s159 = ssub.s32 1024, 1024
      %160 = vsyncadd [#allocation4], %s159
      %s162 = sshll.u32 [#allocation3], 4
      %s163 = int_to_ptr.vmem [resolvable:$true] %s162
      %165 = dma.vmem_to_hbm [thread:$0]  %s163, 1024, %s1, [#allocation4]
    $region9: #{tpu_custom_call.1} parent=1 // pred_fallthru
      _
    // Predicated region
    $region10: #{tpu_custom_call.1} parent=1 // pred_check
      _
    $region11: #{tpu_custom_call.1} parent=1 // pred_check_branch
      %167 = sbr.rel (0) target = $region13
    $region12: #{tpu_custom_call.1} parent=1 // pred_region
      %168 = dma.done [#allocation4], 1024
    $region13: #{tpu_custom_call.1} parent=1 // pred_fallthru
      _
    %169 = vsyncpa [#allocation4], 1

</llo_original>
